<compile_context>
chip_gen: v7x
topology: tpu7x:2x2x1
jax: 0.10.0
libtpu: 0.0.40
codegen_flags: <defaults>
</compile_context>

<pallas_src>
import jax
import jax.numpy as jnp
from jax.experimental import pallas as pl
from jax.experimental.pallas import tpu as pltpu

EPS = 1e-5  # torch.nn.LayerNorm default


def _channel_ln_kernel(x_ref, gamma_ref, beta_ref, o_ref):
    # x_ref: (BB, C, TILE_L) -- channels on sublanes, spatial on lanes.
    x = x_ref[...].astype(jnp.float32)
    # One pass over x for both statistics (shorter dependency chain).
    mean = jnp.mean(x, axis=1, keepdims=True)          # (BB, 1, TILE_L)
    msq = jnp.mean(x * x, axis=1, keepdims=True)       # (BB, 1, TILE_L)
    var = jnp.maximum(msq - mean * mean, 0.0)          # biased var (torch LN)
    inv = jax.lax.rsqrt(var + EPS)
    y = (x - mean) * inv
    # gamma/beta: (1, C, 1) broadcast across batch rows and lanes.
    o_ref[...] = (y * gamma_ref[...] + beta_ref[...]).astype(o_ref.dtype)


def _round_up(a, m):
    return (a + m - 1) // m * m


def _native_sublanes(itemsize):
    # f32 -> 8, bf16/f16 -> 16, int8/fp8 -> 32 (sub-32-bit packs along sublanes).
    return max(8 * (4 // max(itemsize, 1)), 8)


def _vmem_profile():
    """Generation-aware (tile_target_bytes, vmem_limit_bytes)."""
    try:
        info = pltpu.get_tpu_info()
        vmem = getattr(info, "vmem_capacity_bytes", None)
        if vmem is not None:
            if vmem <= (96 << 20):
                # v7x-like: 64 MiB physical VMEM per TC -> smaller tiles/limit.
                return 4 << 20, 44 << 20
            # v5e / v6e: 128 MiB physical VMEM -> bigger tiles are free.
            return 6 << 20, 64 << 20
    except Exception:
        pass
    # Conservative fallback, safe on every generation (incl. v7x's 64 MiB).
    return 4 << 20, 40 << 20


def _choose_blocks(B, C, L, itemsize, target_bytes):
    """Pick (batch_block, lane_tile) using the *padded* VMEM footprint."""
    padded_c = _round_up(C, _native_sublanes(itemsize))
    if L <= 512:
        # Small-spatial regime: pack several images per grid step.
        per_row = padded_c * _round_up(L, 128) * itemsize
        bb = int(max(1, min(B, target_bytes // max(per_row, 1))))
        return bb, L
    # Large-spatial regime: one image per step, lane tile multiple of 128.
    per_col = padded_c * itemsize
    tl = (target_bytes // max(per_col, 1)) // 128 * 128
    tl = max(int(tl), 128)
    if tl >= L:
        tl = L  # whole spatial extent in one block (full-dim rule)
    return 1, tl


def channel_layernorm(x_nchw, gamma, beta, *, batch_block=None, tile_l=None):
    """LayerNorm over the channel axis of an NCHW tensor.

    Equivalent to permute(0,2,3,1) -> LayerNorm(C) -> permute(0,3,1,2), but
    computed directly on the (B, C, H*W) view, so there are no extra
    transpose/pad HBM passes around the kernel.

    x_nchw: (B, C, H, W). gamma, beta: (C,). Returns (B, C, H, W).
    """
    B, C, H, W = x_nchw.shape
    L = H * W
    x = x_nchw.reshape(B, C, L)  # metadata-only for contiguous NCHW input

    target_bytes, vmem_limit = _vmem_profile()
    auto_bb, auto_tl = _choose_blocks(B, C, L, x.dtype.itemsize, target_bytes)
    bb = int(batch_block) if batch_block is not None else auto_bb
    tl = int(tile_l) if tile_l is not None else auto_tl

    gamma3 = gamma.astype(jnp.float32).reshape(1, C, 1)
    beta3 = beta.astype(jnp.float32).reshape(1, C, 1)

    grid = (pl.cdiv(B, bb), pl.cdiv(L, tl))
    out = pl.pallas_call(
        _channel_ln_kernel,
        out_shape=jax.ShapeDtypeStruct((B, C, L), x.dtype),
        grid=grid,
        in_specs=[
            pl.BlockSpec((bb, C, tl), lambda b, l: (b, 0, l)),
            pl.BlockSpec((1, C, 1), lambda b, l: (0, 0, 0)),
            pl.BlockSpec((1, C, 1), lambda b, l: (0, 0, 0)),
        ],
        out_specs=pl.BlockSpec((bb, C, tl), lambda b, l: (b, 0, l)),
        compiler_params=pltpu.CompilerParams(
            dimension_semantics=("parallel", "parallel"),
            vmem_limit_bytes=vmem_limit,
        ),
    )(x, gamma3, beta3)

    return out.reshape(B, C, H, W)


def _reference(x_nchw, gamma, beta):
    x = jnp.transpose(x_nchw, (0, 2, 3, 1)).astype(jnp.float32)
    mean = jnp.mean(x, axis=-1, keepdims=True)
    var = jnp.mean((x - mean) ** 2, axis=-1, keepdims=True)
    y = (x - mean) / jnp.sqrt(var + EPS) * gamma + beta
    return jnp.transpose(y, (0, 3, 1, 2)).astype(x_nchw.dtype)


if __name__ == "__main__":
    key = jax.random.PRNGKey(0)
    B, C, H, W = 2, 4, 16, 16
    x = jax.random.normal(key, (B, C, H, W), dtype=jnp.float32)

    # Non-trivial affine params (deterministic) to exercise gamma/beta broadcast.
    gamma = 1.0 + 0.1 * jnp.arange(C, dtype=jnp.float32)
    beta = 0.05 * jnp.arange(C, dtype=jnp.float32)

    # 1) Auto path: small-L regime packs both images in one block.
    out = jax.block_until_ready(channel_layernorm(x, gamma, beta))
    ref = _reference(x, gamma, beta)
    assert out.shape == (B, C, H, W)
    assert jnp.allclose(out, ref, atol=2e-5, rtol=2e-5), float(
        jnp.max(jnp.abs(out - ref))
    )

    # 2) Ragged-lane check: L=225 with a forced 128-lane tile (masked last block).
    H2, W2 = 15, 15
    x2 = jax.random.normal(jax.random.PRNGKey(1), (B, C, H2, W2), dtype=jnp.float32)
    out2 = jax.block_until_ready(
        channel_layernorm(x2, gamma, beta, batch_block=1, tile_l=128)
    )
    ref2 = _reference(x2, gamma, beta)
    assert jnp.allclose(out2, ref2, atol=2e-5, rtol=2e-5), float(
        jnp.max(jnp.abs(out2 - ref2))
    )

    # 3) Ragged-batch check: B=3 with a forced batch block of 2 (masked last block).
    x3 = jax.random.normal(jax.random.PRNGKey(2), (3, C, H, W), dtype=jnp.float32)
    out3 = jax.block_until_ready(channel_layernorm(x3, gamma, beta, batch_block=2))
    ref3 = _reference(x3, gamma, beta)
    assert jnp.allclose(out3, ref3, atol=2e-5, rtol=2e-5), float(
        jnp.max(jnp.abs(out3 - ref3))
    )

    print("KERNEL_OK")
</pallas_src>

<mosaic_0001>
module attributes {stable_mosaic.version = 11 : i64} {
  func.func @_channel_ln_kernel(%arg0: i32, %arg1: i32, %arg2: memref<2x4x256xf32, #tpu.memory_space<vmem>>, %arg3: memref<1x4x1xf32, #tpu.memory_space<vmem>>, %arg4: memref<1x4x1xf32, #tpu.memory_space<vmem>>, %arg5: memref<2x4x256xf32, #tpu.memory_space<vmem>>) attributes {dimension_semantics = [#tpu.dimension_semantics<parallel>, #tpu.dimension_semantics<parallel>], iteration_bounds = array<i64: 1, 1>, scalar_prefetch = 0 : i64, scratch_operands = 0 : i64, tpu.core_type = #tpu.core_type<tc>, window_params = [{transform_indices = @transform_0, window_bounds = array<i64: 2, 4, 256>}, {pipeline_mode = #tpu.pipeline_mode<synchronous>, transform_indices = @transform_1, window_bounds = array<i64: 1, 4, 1>}, {pipeline_mode = #tpu.pipeline_mode<synchronous>, transform_indices = @transform_2, window_bounds = array<i64: 1, 4, 1>}, {transform_indices = @transform_3, window_bounds = array<i64: 2, 4, 256>}]} {
    %c0 = arith.constant 0 : index
    %c0_0 = arith.constant 0 : index
    %c0_1 = arith.constant 0 : index
    %0 = vector.load %arg2[%c0, %c0_0, %c0_1] : memref<2x4x256xf32, #tpu.memory_space<vmem>>, vector<2x4x256xf32>
    %cst = arith.constant dense<0.000000e+00> : vector<2x256xf32>
    %1 = vector.multi_reduction <add>, %0, %cst [1] : vector<2x4x256xf32> to vector<2x256xf32>
    %2 = vector.shape_cast %1 : vector<2x256xf32> to vector<2x1x256xf32>
    %cst_2 = arith.constant 4.000000e+00 : f32
    %3 = vector.broadcast %cst_2 : f32 to vector<2x1x256xf32>
    %4 = arith.divf %2, %3 : vector<2x1x256xf32>
    %5 = arith.mulf %0, %0 : vector<2x4x256xf32>
    %cst_3 = arith.constant dense<0.000000e+00> : vector<2x256xf32>
    %6 = vector.multi_reduction <add>, %5, %cst_3 [1] : vector<2x4x256xf32> to vector<2x256xf32>
    %7 = vector.shape_cast %6 : vector<2x256xf32> to vector<2x1x256xf32>
    %cst_4 = arith.constant 4.000000e+00 : f32
    %8 = vector.broadcast %cst_4 : f32 to vector<2x1x256xf32>
    %9 = arith.divf %7, %8 : vector<2x1x256xf32>
    %10 = arith.mulf %4, %4 : vector<2x1x256xf32>
    %11 = arith.subf %9, %10 : vector<2x1x256xf32>
    %cst_5 = arith.constant 0.000000e+00 : f32
    %12 = vector.broadcast %cst_5 : f32 to vector<2x1x256xf32>
    %13 = arith.maximumf %11, %12 : vector<2x1x256xf32>
    %cst_6 = arith.constant 9.99999974E-6 : f32
    %14 = vector.broadcast %cst_6 : f32 to vector<2x1x256xf32>
    %15 = arith.addf %13, %14 : vector<2x1x256xf32>
    %16 = math.rsqrt %15 : vector<2x1x256xf32>
    %17 = vector.broadcast %4 : vector<2x1x256xf32> to vector<2x4x256xf32>
    %18 = arith.subf %0, %17 : vector<2x4x256xf32>
    %19 = vector.broadcast %16 : vector<2x1x256xf32> to vector<2x4x256xf32>
    %20 = arith.mulf %18, %19 : vector<2x4x256xf32>
    %c0_7 = arith.constant 0 : index
    %c0_8 = arith.constant 0 : index
    %c0_9 = arith.constant 0 : index
    %21 = vector.load %arg3[%c0_7, %c0_8, %c0_9] : memref<1x4x1xf32, #tpu.memory_space<vmem>>, vector<1x4x1xf32>
    %22 = vector.broadcast %21 : vector<1x4x1xf32> to vector<2x4x256xf32>
    %23 = arith.mulf %20, %22 : vector<2x4x256xf32>
    %c0_10 = arith.constant 0 : index
    %c0_11 = arith.constant 0 : index
    %c0_12 = arith.constant 0 : index
    %24 = vector.load %arg4[%c0_10, %c0_11, %c0_12] : memref<1x4x1xf32, #tpu.memory_space<vmem>>, vector<1x4x1xf32>
    %25 = vector.broadcast %24 : vector<1x4x1xf32> to vector<2x4x256xf32>
    %26 = arith.addf %23, %25 : vector<2x4x256xf32>
    %c0_13 = arith.constant 0 : index
    %c0_14 = arith.constant 0 : index
    %c0_15 = arith.constant 0 : index
    %27 = vector.load %arg5[%c0_13, %c0_14, %c0_15] : memref<2x4x256xf32, #tpu.memory_space<vmem>>, vector<2x4x256xf32>
    tpu.vector_store %arg5[%c0_13, %c0_14, %c0_15], %26 {strides = array<i32>} : memref<2x4x256xf32, #tpu.memory_space<vmem>>, vector<2x4x256xf32>,
    return
  }
  func.func @transform_0(%arg0: i32, %arg1: i32) -> (i32, i32, i32) {
    %c0_i32 = arith.constant 0 : i32
    %c0_i32_0 = arith.constant 0 : i32
    return %arg0, %c0_i32, %arg1 : i32, i32, i32
  }
  func.func @transform_1(%arg0: i32, %arg1: i32) -> (i32, i32, i32) {
    %c0_i32 = arith.constant 0 : i32
    %c0_i32_0 = arith.constant 0 : i32
    %c0_i32_1 = arith.constant 0 : i32
    %c0_i32_2 = arith.constant 0 : i32
    return %c0_i32, %c0_i32_0, %c0_i32_1 : i32, i32, i32
  }
  func.func @transform_2(%arg0: i32, %arg1: i32) -> (i32, i32, i32) {
    %c0_i32 = arith.constant 0 : i32
    %c0_i32_0 = arith.constant 0 : i32
    %c0_i32_1 = arith.constant 0 : i32
    %c0_i32_2 = arith.constant 0 : i32
    return %c0_i32, %c0_i32_0, %c0_i32_1 : i32, i32, i32
  }
  func.func @transform_3(%arg0: i32, %arg1: i32) -> (i32, i32, i32) {
    %c0_i32 = arith.constant 0 : i32
    %c0_i32_0 = arith.constant 0 : i32
    return %arg0, %c0_i32, %arg1 : i32, i32, i32
  }
}

</mosaic_0001>

<llo_original>
// kernel: tpu_custom_call.1
$region0: #{tpu_custom_call.1}
  #allocation0 [shape = 'u32[]', space=smem, size = 0x4, offset = 0x4, fixed_abs, tag = 'smem constant byte address 0x4 - core index']
  #allocation1 [shape = 'u32[144,128]{1,0:T(1,128)}', space=vmem, size = 0x12000, scoped, tag = 'internal scratch']
  %s0 = inlined_call_operand.hbm [shape: f32[2,4,256], index: 0, kind: input, shape index: {}]
  %s1 = inlined_call_operand.vmem [shape: f32[1,4,1], index: 1, kind: input, shape index: {}]
  %s2 = inlined_call_operand.vmem [shape: f32[1,4,1], index: 2, kind: input, shape index: {}]
  %s3 = inlined_call_operand.hbm [shape: f32[2,4,256], index: 3, kind: output, shape index: {}]
  %s4 = sld [smem:[#allocation0]]
  $region26: #{tpu_custom_call.1} parent=0
    _
  %s6 = ssub.s32 1, %s4
  %s7 = scalar_select 0, %s6, %s4
  $region1: #{tpu_custom_call.1} parent=0
    #allocation2 [shape = 'u8[8192]{0}', space=vmem, size = 0x2000, scoped, tag = 'input window, operand 0, single buffered']
    #allocation3 [shape = 's32[1]{0}', space=sflag, size = 0x4, scoped, tag = 'scoped memory for tpu_custom_call.1']
    #allocation4 [shape = 's32[1]{0}', space=sflag, size = 0x4, scoped, tag = 'scoped memory for tpu_custom_call.1']
    #allocation5 [shape = 'u8[8192]{0}', space=vmem, size = 0x2000, scoped, tag = 'output window, operand 0, single buffered']
    %8 = vsyncpa [#allocation3], 0
    %9 = vsyncpa [#allocation4], 0
    // Predicated region
    $region2: #{tpu_custom_call.1} parent=1 // pred_check
      _
    $region3: #{tpu_custom_call.1} parent=1 // pred_check_branch
      %11 = sbr.rel (0) target = $region5
    $region4: #{tpu_custom_call.1} parent=1 // pred_region
      %s13 = ssub.s32 256, 256
      %14 = vsyncadd [#allocation3], %s13
      %s15 = sshll.u32 [#allocation2], 4
      %s16 = int_to_ptr.vmem [resolvable:$true] %s15
      %21 = dma.hbm_to_vmem [thread:$0]  %s0, 256, %s16, [#allocation3], 128, 128, 8
    $region5: #{tpu_custom_call.1} parent=1 // pred_fallthru
      _
    // Predicated region
    $region6: #{tpu_custom_call.1} parent=1 // pred_check
      _
    $region7: #{tpu_custom_call.1} parent=1 // pred_check_branch
      %23 = sbr.rel (0) target = $region9
    $region8: #{tpu_custom_call.1} parent=1 // pred_region
      _
    $region9: #{tpu_custom_call.1} parent=1 // pred_fallthru
      _
    // Predicated region
    $region10: #{tpu_custom_call.1} parent=1 // pred_check
      _
    $region11: #{tpu_custom_call.1} parent=1 // pred_check_branch
      %25 = sbr.rel (0) target = $region13
    $region12: #{tpu_custom_call.1} parent=1 // pred_region
      _
    $region13: #{tpu_custom_call.1} parent=1 // pred_fallthru
      _
    // Predicated region
    $region14: #{tpu_custom_call.1} parent=1 // pred_check
      _
    $region15: #{tpu_custom_call.1} parent=1 // pred_check_branch
      %27 = sbr.rel (0) target = $region17
    $region16: #{tpu_custom_call.1} parent=1 // pred_region
      %28 = dma.done [#allocation3], 256
    $region17: #{tpu_custom_call.1} parent=1 // pred_fallthru
      _
    %v29 = vld [vmem:[#allocation2] sm:$0xff]
    %v30 = vld [vmem:[#allocation2 + $0x8] sm:$0xff]
    %v33 = vcombine.high %v29, %v29
    %v34 = vcombine.high %v30, %v30
    %vm37 = vcmask 1043456
    %v38 = vsel %vm37, %v29, 0.0
    %v39 = vrot.slane %v38, 4
    %v40 = vadd.f32 %v38, %v39
    %v41 = vrot.slane %v40, 2
    %v42 = vadd.f32 %v40, %v41
    %v43 = vrot.slane %v42, 1
    %v44 = vadd.f32 %v42, %v43
    %v45 = vsel %vm37, %v33, 0.0
    %v46 = vrot.slane %v45, 4
    %v47 = vadd.f32 %v45, %v46
    %v48 = vrot.slane %v47, 2
    %v49 = vadd.f32 %v47, %v48
    %v50 = vrot.slane %v49, 1
    %v51 = vadd.f32 %v49, %v50
    %v52 = vsel %vm37, %v30, 0.0
    %v53 = vrot.slane %v52, 4
    %v54 = vadd.f32 %v52, %v53
    %v55 = vrot.slane %v54, 2
    %v56 = vadd.f32 %v54, %v55
    %v57 = vrot.slane %v56, 1
    %v58 = vadd.f32 %v56, %v57
    %v59 = vsel %vm37, %v34, 0.0
    %v60 = vrot.slane %v59, 4
    %v61 = vadd.f32 %v59, %v60
    %v62 = vrot.slane %v61, 2
    %v63 = vadd.f32 %v61, %v62
    %v64 = vrot.slane %v63, 1
    %v65 = vadd.f32 %v63, %v64
    %v66 = vrcp.pop 4.0
    %v67 = vmul.f32 %v44, %v66
    %v68 = vmul.f32 %v51, %v66
    %v69 = vmul.f32 %v58, %v66
    %v70 = vmul.f32 %v65, %v66
    %v71 = vmul.f32 %v29, %v29
    %v72 = vmul.f32 %v30, %v30
    %v75 = vcombine.high %v71, %v71
    %v76 = vcombine.high %v72, %v72
    %v79 = vsel %vm37, %v71, 0.0
    %v80 = vrot.slane %v79, 4
    %v81 = vadd.f32 %v79, %v80
    %v82 = vrot.slane %v81, 2
    %v83 = vadd.f32 %v81, %v82
    %v84 = vrot.slane %v83, 1
    %v85 = vadd.f32 %v83, %v84
    %v86 = vsel %vm37, %v75, 0.0
    %v87 = vrot.slane %v86, 4
    %v88 = vadd.f32 %v86, %v87
    %v89 = vrot.slane %v88, 2
    %v90 = vadd.f32 %v88, %v89
    %v91 = vrot.slane %v90, 1
    %v92 = vadd.f32 %v90, %v91
    %v93 = vsel %vm37, %v72, 0.0
    %v94 = vrot.slane %v93, 4
    %v95 = vadd.f32 %v93, %v94
    %v96 = vrot.slane %v95, 2
    %v97 = vadd.f32 %v95, %v96
    %v98 = vrot.slane %v97, 1
    %v99 = vadd.f32 %v97, %v98
    %v100 = vsel %vm37, %v76, 0.0
    %v101 = vrot.slane %v100, 4
    %v102 = vadd.f32 %v100, %v101
    %v103 = vrot.slane %v102, 2
    %v104 = vadd.f32 %v102, %v103
    %v105 = vrot.slane %v104, 1
    %v106 = vadd.f32 %v104, %v105
    %v107 = vmul.f32 %v85, %v66
    %v108 = vmul.f32 %v92, %v66
    %v109 = vmul.f32 %v99, %v66
    %v110 = vmul.f32 %v106, %v66
    %v111 = vmul.f32 %v67, %v67
    %v112 = vmul.f32 %v68, %v68
    %v113 = vmul.f32 %v69, %v69
    %v114 = vmul.f32 %v70, %v70
    %v115 = vsub.f32 %v107, %v111
    %v116 = vsub.f32 %v108, %v112
    %v117 = vsub.f32 %v109, %v113
    %v118 = vsub.f32 %v110, %v114
    %v119 = vmax.f32 %v115, 0.0
    %v120 = vmax.f32 %v116, 0.0
    %v121 = vmax.f32 %v117, 0.0
    %v122 = vmax.f32 %v118, 0.0
    %v123 = vadd.f32 %v119, 1e-05
    %v124 = vadd.f32 %v120, 1e-05
    %v125 = vadd.f32 %v121, 1e-05
    %v126 = vadd.f32 %v122, 1e-05
    %v127 = vrsqrt.pop %v123
    %v128 = vrsqrt.pop %v124
    %v129 = vrsqrt.pop %v125
    %v130 = vrsqrt.pop %v126
    %v135 = vcombine.low %v67, %v68
    %v136 = vcombine.low %v69, %v70
    %v139 = vsub.f32 %v29, %v135
    %v140 = vsub.f32 %v30, %v136
    %v145 = vcombine.low %v127, %v128
    %v146 = vcombine.low %v129, %v130
    %v149 = vmul.f32 %v139, %v145
    %v150 = vmul.f32 %v140, %v146
    %v151 = vld [vmem:[%s1] sm:$0xf]
    %153 = vset.pattern.permute.xlu0 0
    %154 = vperm.xlu0 %153, %v151
    %v155 = vpop.permute.xlu0 %154
    %v157 = vunpack.c.l.s4 839922192
    %v158 = vunpack.c.0.s8 %v157
    %v159 = vlaneseq
    %v160 = vshrl.u32 %v159, 7
    %v161 = vsub.s32 %v158, %v160
    %v162 = vrot.slane %v155, %v161
    %v164 = vmul.f32 %v149, %v162
    %v165 = vmul.f32 %v150, %v162
    %v166 = vld [vmem:[%s2] sm:$0xf]
    %168 = vset.pattern.permute.xlu0 0
    %169 = vperm.xlu0 %168, %v166
    %v170 = vpop.permute.xlu0 %169
    %v172 = vunpack.c.l.s4 839922192
    %v173 = vunpack.c.0.s8 %v172
    %v174 = vlaneseq
    %v175 = vshrl.u32 %v174, 7
    %v176 = vsub.s32 %v173, %v175
    %v177 = vrot.slane %v170, %v176
    %v179 = vadd.f32 %v164, %v177
    %v180 = vadd.f32 %v165, %v177
    %181 = vst [vmem:[#allocation5] sm:$0xff] %v179
    %182 = vst [vmem:[#allocation5 + $0x8] sm:$0xff] %v180
    // Predicated region
    $region18: #{tpu_custom_call.1} parent=1 // pred_check
      _
    $region19: #{tpu_custom_call.1} parent=1 // pred_check_branch
      %184 = sbr.rel (0) target = $region21
    $region20: #{tpu_custom_call.1} parent=1 // pred_region
      %s186 = ssub.s32 256, 256
      %187 = vsyncadd [#allocation4], %s186
      %s188 = sshll.u32 [#allocation5], 4
      %s189 = int_to_ptr.vmem [resolvable:$true] %s188
      %194 = dma.vmem_to_hbm [thread:$0]  %s189, 256, %s3, [#allocation4], 128, 128, 8
    $region21: #{tpu_custom_call.1} parent=1 // pred_fallthru
      _
    // Predicated region
    $region22: #{tpu_custom_call.1} parent=1 // pred_check
      _
    $region23: #{tpu_custom_call.1} parent=1 // pred_check_branch
      %196 = sbr.rel (0) target = $region25
    $region24: #{tpu_custom_call.1} parent=1 // pred_region
      %197 = dma.done [#allocation4], 256
    $region25: #{tpu_custom_call.1} parent=1 // pred_fallthru
      _
    %198 = vsyncpa [#allocation3], 1
    %199 = vsyncpa [#allocation4], 1

</llo_original>
